<compile_context>
chip_gen: v6e
topology: v6e:2x2x1
jax: 0.10.0
libtpu: 0.0.40
codegen_flags: <defaults>
</compile_context>

<pallas_src>
import functools

import jax
import jax.numpy as jnp
from jax.experimental import pallas as pl
from jax.experimental.pallas import tpu as pltpu

BN_EPS = 0.8          # nn.BatchNorm2d(out_size, 0.8) -> eps = 0.8
LEAKY_SLOPE = 0.2


def _round_up(x, m):
    return (x + m - 1) // m * m


def _vmem_budget_bytes():
    """Per-generation scoped-VMEM budget. v5e/v6e: 128 MiB physical -> 64 MiB budget;
    v7x (64 MiB physical) or unknown -> conservative 28 MiB budget."""
    try:
        phys = pltpu.get_tpu_info().vmem_capacity_bytes
    except Exception:
        phys = 0
    if phys >= (100 << 20):
        return 64 << 20
    return 28 << 20


def _choose_tile_r(rows, k_pad, o_pad, tap_bytes, conv_bytes, budget,
                   align=16, max_tile=1024):
    # Live-VMEM model for pass 1 (default double-buffering on every operand):
    #   taps   : 2 * tile_r * k_pad * tap_bytes
    #   weight : 2 * k_pad * o_pad * tap_bytes   (constant index_map, still 2 bufs)
    #   conv   : 2 * tile_r * o_pad * conv_bytes
    #   stats  : 2 * 8 * o_pad * 4               (negligible)
    fixed = 2 * k_pad * o_pad * tap_bytes + 2 * 8 * o_pad * 4
    per_row = 2 * k_pad * tap_bytes + 2 * o_pad * conv_bytes
    avail = max(budget - fixed, per_row * align)
    tile = min(max_tile, (avail // per_row) // align * align)
    tile = max(tile, align)
    # Guarantee >= 2 grid steps so both v7x TensorCores get work on the "parallel"
    # axis, and never tile past the (padded) row count.
    cap = max(_round_up(-(-rows // 2), align), align)
    return min(tile, cap)


# ----------------- Pass 1: single big-K implicit-GEMM conv + channel stats -----------------
def _conv_stats_kernel(x_ref, w_ref, conv_ref, stats_ref):
    # x_ref    : (tile_r, K_pad)  im2col row tile, lane-dense K = round_up(9*Cin, 128)
    # w_ref    : (K_pad, O_pad)   folded conv weights (VMEM-resident across the grid)
    # conv_ref : (tile_r, O_pad)  conv output tile
    # stats_ref: (1, 8, O_pad)    sublane 0 = per-channel sum, sublane 1 = sum of squares
    acc = jnp.dot(x_ref[...], w_ref[...], preferred_element_type=jnp.float32)
    conv_ref[...] = acc.astype(conv_ref.dtype)
    stats_ref[0, 0:1, :] = jnp.sum(acc, axis=0, keepdims=True)
    stats_ref[0, 1:2, :] = jnp.sum(acc * acc, axis=0, keepdims=True)


def unet_down(x_nchw, w_oikk, bias, gamma, beta, *,
              matmul_dtype=jnp.bfloat16, conv_dtype=jnp.float32, tile_r=None):
    """x_nchw: (N, Cin, H, W); w_oikk: (O, Cin, 3, 3). Returns (N, O, H//2, W//2)."""
    del bias  # exactly cancelled by training-mode BatchNorm mean subtraction

    n, cin, h, w = x_nchw.shape
    o = w_oikk.shape[0]
    ho = (h + 2 - 3) // 2 + 1
    wo = (w + 2 - 3) // 2 + 1
    rows = n * ho * wo
    k = 9 * cin
    k_pad = _round_up(k, 128)          # lane-dense contraction dim
    o_pad = _round_up(o, 128)          # lane-dense output channels

    tap_bytes = jnp.finfo(matmul_dtype).bits // 8
    conv_bytes = jnp.finfo(conv_dtype).bits // 8
    budget = _vmem_budget_bytes()
    if tile_r is None:
        tile_r = _choose_tile_r(rows, k_pad, o_pad, tap_bytes, conv_bytes,
                                budget - (4 << 20))
    assert tile_r % 16 == 0, "tile_r must be a multiple of 16 (bf16 sublane tile)"
    num_tiles = pl.cdiv(rows, tile_r)
    r_pad = num_tiles * tile_r

    # --- explicit lane-dense im2col: (rows, 9*Cin) row-major, tap order (kh, kw, Cin) ---
    x_nhwc = jnp.transpose(x_nchw, (0, 2, 3, 1))
    xp = jnp.pad(x_nhwc, ((0, 0), (1, 1), (1, 1), (0, 0)))
    taps = [xp[:, kh:kh + 2 * ho:2, kw:kw + 2 * wo:2, :]          # (N, Ho, Wo, Cin)
            for kh in range(3) for kw in range(3)]
    im2col = jnp.concatenate(taps, axis=-1).reshape(rows, k)
    im2col = jnp.pad(im2col, ((0, r_pad - rows), (0, k_pad - k)))  # zero rows -> zero stats
    im2col = im2col.astype(matmul_dtype)

    # weights: (O, Cin, 3, 3) -> (kh, kw, Cin, O) -> (9*Cin, O) -> (K_pad, O_pad)
    w_k = jnp.transpose(w_oikk, (2, 3, 1, 0)).reshape(k, o)
    w_k = jnp.pad(w_k, ((0, k_pad - k), (0, o_pad - o))).astype(matmul_dtype)

    conv_out, stats = pl.pallas_call(
        _conv_stats_kernel,
        out_shape=(jax.ShapeDtypeStruct((r_pad, o_pad), conv_dtype),
                   jax.ShapeDtypeStruct((num_tiles, 8, o_pad), jnp.float32)),
        grid_spec=pltpu.PrefetchScalarGridSpec(
            num_scalar_prefetch=0,
            grid=(num_tiles,),
            in_specs=[pl.BlockSpec((tile_r, k_pad), lambda i: (i, 0)),
                      pl.BlockSpec((k_pad, o_pad), lambda i: (0, 0))],
            out_specs=[pl.BlockSpec((tile_r, o_pad), lambda i: (i, 0)),
                       pl.BlockSpec((1, 8, o_pad), lambda i: (i, 0, 0))],
        ),
        compiler_params=pltpu.CompilerParams(
            dimension_semantics=("parallel",),   # shards row tiles across TCs (v7x)
            vmem_limit_bytes=budget,
        ),
    )(im2col, w_k)

    # --- tiny per-channel reduce + BN coefficient fusion (O-sized work only) ---
    inv_r = jnp.float32(1.0 / rows)                      # divide by true row count
    sum_c = jnp.sum(stats[:, 0, :o], axis=0)
    sumsq_c = jnp.sum(stats[:, 1, :o], axis=0)
    mean = sum_c * inv_r
    var = jnp.maximum(sumsq_c * inv_r - mean * mean, 0.0)  # biased var (training mode)
    scale = gamma.astype(jnp.float32) * jax.lax.rsqrt(var + BN_EPS)
    shift = beta.astype(jnp.float32) - mean * scale

    # --- fused XLA epilogue: affine + LeakyReLU folded into the NCHW transpose ---
    y = conv_out[:rows, :o].astype(jnp.float32) * scale[None, :] + shift[None, :]
    y = jnp.where(y > 0, y, LEAKY_SLOPE * y)
    y = y.reshape(n, ho, wo, o)
    return jnp.transpose(y, (0, 3, 1, 2))                # back to NCHW


def _reference(x_nchw, w_oikk, bias, gamma, beta):
    """Plain-JAX reference (matches the PyTorch module in training mode)."""
    y = jax.lax.conv_general_dilated(
        x_nchw, w_oikk, window_strides=(2, 2), padding=((1, 1), (1, 1)),
        dimension_numbers=("NCHW", "OIHW", "NCHW"))
    y = y + bias[None, :, None, None]
    mean = jnp.mean(y, axis=(0, 2, 3), keepdims=True)
    var = jnp.mean((y - mean) ** 2, axis=(0, 2, 3), keepdims=True)
    y = (y - mean) * jax.lax.rsqrt(var + BN_EPS)
    y = gamma[None, :, None, None] * y + beta[None, :, None, None]
    return jnp.where(y > 0, y, LEAKY_SLOPE * y)


if __name__ == "__main__":
    key = jax.random.PRNGKey(0)
    kx, kw, kb, kg, kbeta = jax.random.split(key, 5)

    N, CIN, H, W = 2, 4, 16, 16
    COUT = 8

    x = jax.random.normal(kx, (N, CIN, H, W), dtype=jnp.float32)
    w = jax.random.normal(kw, (COUT, CIN, 3, 3), dtype=jnp.float32) * 0.1
    b = jax.random.normal(kb, (COUT,), dtype=jnp.float32) * 0.1
    gamma = 1.0 + 0.1 * jax.random.normal(kg, (COUT,), dtype=jnp.float32)
    beta = 0.1 * jax.random.normal(kbeta, (COUT,), dtype=jnp.float32)
    # TODO(synk): Dropout is 0.0 in the default module config, so it is omitted.

    ref = _reference(x, w, b, gamma, beta)

    # Default fast path: bf16 MXU inputs, f32 accumulation (loose tolerance vs f32 ref).
    # Auto-derived tile_r already yields 2 row tiles here (rows=128 -> tile_r=64).
    run_bf16 = jax.jit(unet_down)
    out_bf16 = jax.block_until_ready(run_bf16(x, w, b, gamma, beta))
    assert out_bf16.shape == (N, COUT, H // 2, W // 2), out_bf16.shape
    assert jnp.allclose(out_bf16, ref, atol=5e-2, rtol=5e-2), float(
        jnp.max(jnp.abs(out_bf16 - ref)))

    # Exact-math path: f32 MXU inputs, tight tolerance.
    run_f32 = jax.jit(functools.partial(unet_down, matmul_dtype=jnp.float32))
    out_f32 = jax.block_until_ready(run_f32(x, w, b, gamma, beta))
    assert jnp.allclose(out_f32, ref, atol=1e-4, rtol=1e-4), float(
        jnp.max(jnp.abs(out_f32 - ref)))

    print("KERNEL_OK")
</pallas_src>

<mosaic_0001>
module attributes {stable_mosaic.version = 11 : i64} {
  func.func @_conv_stats_kernel(%arg0: i32, %arg1: memref<64x128xbf16, #tpu.memory_space<vmem>>, %arg2: memref<128x128xbf16, #tpu.memory_space<vmem>>, %arg3: memref<64x128xf32, #tpu.memory_space<vmem>>, %arg4: memref<1x8x128xf32, #tpu.memory_space<vmem>>) attributes {dimension_semantics = [#tpu.dimension_semantics<parallel>], iteration_bounds = array<i64: 2>, scalar_prefetch = 0 : i64, scratch_operands = 0 : i64, tpu.core_type = #tpu.core_type<tc>, window_params = [{transform_indices = @transform_0, window_bounds = array<i64: 64, 128>}, {pipeline_mode = #tpu.pipeline_mode<synchronous>, transform_indices = @transform_1, window_bounds = array<i64: 128, 128>}, {transform_indices = @transform_2, window_bounds = array<i64: 64, 128>}, {transform_indices = @transform_3, window_bounds = array<i64: 1, 8, 128>}]} {
    %c0 = arith.constant 0 : index
    %c0_0 = arith.constant 0 : index
    %0 = vector.load %arg1[%c0, %c0_0] : memref<64x128xbf16, #tpu.memory_space<vmem>>, vector<64x128xbf16>
    %c0_1 = arith.constant 0 : index
    %c0_2 = arith.constant 0 : index
    %1 = vector.load %arg2[%c0_1, %c0_2] : memref<128x128xbf16, #tpu.memory_space<vmem>>, vector<128x128xbf16>
    %cst = arith.constant dense<0.000000e+00> : vector<64x128xf32>
    %2 = tpu.matmul %0, %1, %cst {dimension_numbers = #tpu.dot_dimension_numbers<[1], [0], [0], [1], [0, 0, 1, 1], [], []>} : vector<64x128xbf16>, vector<128x128xbf16>, vector<64x128xf32> -> vector<64x128xf32>
    %c0_3 = arith.constant 0 : index
    %c0_4 = arith.constant 0 : index
    %3 = vector.load %arg3[%c0_3, %c0_4] : memref<64x128xf32, #tpu.memory_space<vmem>>, vector<64x128xf32>
    tpu.vector_store %arg3[%c0_3, %c0_4], %2 {strides = array<i32>} : memref<64x128xf32, #tpu.memory_space<vmem>>, vector<64x128xf32>,
    %cst_5 = arith.constant dense<0.000000e+00> : vector<128xf32>
    %4 = vector.multi_reduction <add>, %2, %cst_5 [0] : vector<64x128xf32> to vector<128xf32>
    %5 = vector.shape_cast %4 : vector<128xf32> to vector<1x128xf32>
    %c0_6 = arith.constant 0 : index
    %c0_7 = arith.constant 0 : index
    %c0_8 = arith.constant 0 : index
    %6 = vector.load %arg4[%c0_6, %c0_7, %c0_8] : memref<1x8x128xf32, #tpu.memory_space<vmem>>, vector<1x1x128xf32>
    %7 = vector.shape_cast %6 : vector<1x1x128xf32> to vector<1x128xf32>
    %8 = vector.shape_cast %5 : vector<1x128xf32> to vector<1x1x128xf32>
    tpu.vector_store %arg4[%c0_6, %c0_7, %c0_8], %8 {strides = array<i32>} : memref<1x8x128xf32, #tpu.memory_space<vmem>>, vector<1x1x128xf32>,
    %9 = arith.mulf %2, %2 : vector<64x128xf32>
    %cst_9 = arith.constant dense<0.000000e+00> : vector<128xf32>
    %10 = vector.multi_reduction <add>, %9, %cst_9 [0] : vector<64x128xf32> to vector<128xf32>
    %11 = vector.shape_cast %10 : vector<128xf32> to vector<1x128xf32>
    %c0_10 = arith.constant 0 : index
    %c1 = arith.constant 1 : index
    %c0_11 = arith.constant 0 : index
    %12 = vector.load %arg4[%c0_10, %c1, %c0_11] : memref<1x8x128xf32, #tpu.memory_space<vmem>>, vector<1x1x128xf32>
    %13 = vector.shape_cast %12 : vector<1x1x128xf32> to vector<1x128xf32>
    %14 = vector.shape_cast %11 : vector<1x128xf32> to vector<1x1x128xf32>
    tpu.vector_store %arg4[%c0_10, %c1, %c0_11], %14 {strides = array<i32>} : memref<1x8x128xf32, #tpu.memory_space<vmem>>, vector<1x1x128xf32>,
    return
  }
  func.func @transform_0(%arg0: i32) -> (i32, i32) {
    %c0_i32 = arith.constant 0 : i32
    %c0_i32_0 = arith.constant 0 : i32
    return %arg0, %c0_i32 : i32, i32
  }
  func.func @transform_1(%arg0: i32) -> (i32, i32) {
    %c0_i32 = arith.constant 0 : i32
    %c0_i32_0 = arith.constant 0 : i32
    %c0_i32_1 = arith.constant 0 : i32
    return %c0_i32, %c0_i32_0 : i32, i32
  }
  func.func @transform_2(%arg0: i32) -> (i32, i32) {
    %c0_i32 = arith.constant 0 : i32
    %c0_i32_0 = arith.constant 0 : i32
    return %arg0, %c0_i32 : i32, i32
  }
  func.func @transform_3(%arg0: i32) -> (i32, i32, i32) {
    %c0_i32 = arith.constant 0 : i32
    %c0_i32_0 = arith.constant 0 : i32
    %c0_i32_1 = arith.constant 0 : i32
    return %arg0, %c0_i32, %c0_i32_0 : i32, i32, i32
  }
}

</mosaic_0001>

<llo_original>
// kernel: unet_down.1
$region0: #{unet_down.1}
  #allocation0 [shape = 'u32[]', space=smem, size = 0x4, offset = 0x4, fixed_abs, tag = 'smem constant byte address 0x4 - core index']
  #allocation1 [shape = 'u32[144,128]{1,0:T(1,128)}', space=vmem, size = 0x12000, scoped, tag = 'internal scratch']
  %s0 = inlined_call_operand.vmem [shape: bf16[128,128], index: 0, kind: input, shape index: {}]
  %s1 = inlined_call_operand.vmem [shape: bf16[128,128], index: 1, kind: input, shape index: {}]
  %s2 = inlined_call_operand.vmem [shape: f32[128,128], index: 2, kind: output, shape index: {0}]
  %s3 = inlined_call_operand.vmem [shape: f32[2,8,128], index: 3, kind: output, shape index: {1}]
  %4 = xla_tuple %s2, %s3
  %s5 = sld [smem:[#allocation0]]
  $region49: #{unet_down.1} parent=0
    _
  %s7 = ssub.s32 1, %s5
  %s8 = scalar_select 0, %s7, %s5
  loop: start=0, step=1, limit=4
  $region2: #{unet_down.1} parent=0 // loop_pre_header
    _
  $region3: #{unet_down.1} parent=0 // loop_header
    %s10 = sphi 0, %s14
    %p11 = scmp.ge.s32.totalorder %s10, 4
    %s20 = sphi 0, %s22
    %s23 = sphi 0, %s20
    %s24 = sphi 0, %s23
    %s40 = sphi 0, %s24
    %s44 = sphi 0, %s44
    %s46 = sphi 0, %s44
    %s47 = sphi 0, %s46
    %s61 = sphi 0, %s47
    %s67 = sphi 0, %s69
    %s70 = sphi 0, %s67
    %s71 = sphi 0, %s70
    %s87 = sphi 0, %s71
    %s93 = sphi 0, %s95
    %s96 = sphi 0, %s93
    %s97 = sphi 0, %s96
    %s113 = sphi 0, %s97
  $region4: #{unet_down.1} parent=0 // loop_header_branch
    %13 = sbr.rel (%p11) target = $region8
  $region5: #{unet_down.1} parent=0 // loop_body
    %s15 = ssub.s32 %s10, 1
    %s16 = ssub.s32 %s10, 2
    %s17 = sadd.s32 %s10, 1
    %s18 = ssub.s32 %s10, %s17
    %p19 = scmp.eq.s32.totalorder %s18, 0
    %s21 = sadd.s32 %s20, 1
    %s22 = scalar_select %p19, %s20, %s21
    %p25 = pneg %p19
    %p26 = scmp.eq.s32.totalorder %s10, 1
    %p27 = por %p25, %p26
    %p28 = scmp.ne.s32.totalorder %s20, %s23
    %p29 = scmp.eq.s32.totalorder %s10, 0
    %p30 = por %p28, %p29
    %p31 = scmp.ne.s32.totalorder %s20, %s23
    %p32 = scmp.eq.s32.totalorder %s15, 1
    %p33 = por %p31, %p32
    %p34 = scmp.ne.s32.totalorder %s23, %s24
    %p35 = scmp.eq.s32.totalorder %s15, 0
    %p36 = por %p34, %p35
    %p37 = scmp.ne.s32.totalorder %s23, %s24
    %p38 = scmp.eq.s32.totalorder %s16, 1
    %p39 = por %p37, %p38
    %p41 = scmp.ne.s32.totalorder %s24, %s40
    %p42 = scmp.eq.s32.totalorder %s16, 0
    %p43 = por %p41, %p42
    %s45 = sadd.s32 %s44, 1
    %p48 = scmp.eq.s32.totalorder %s10, 1
    %p49 = scmp.ne.s32.totalorder %s44, %s46
    %p50 = scmp.eq.s32.totalorder %s10, 0
    %p51 = por %p49, %p50
    %p52 = scmp.ne.s32.totalorder %s44, %s46
    %p53 = scmp.eq.s32.totalorder %s15, 1
    %p54 = por %p52, %p53
    %p55 = scmp.ne.s32.totalorder %s46, %s47
    %p56 = scmp.eq.s32.totalorder %s15, 0
    %p57 = por %p55, %p56
    %p58 = scmp.ne.s32.totalorder %s46, %s47
    %p59 = scmp.eq.s32.totalorder %s16, 1
    %p60 = por %p58, %p59
    %p62 = scmp.ne.s32.totalorder %s47, %s61
    %p63 = scmp.eq.s32.totalorder %s16, 0
    %p64 = por %p62, %p63
    %s65 = ssub.s32 %s10, %s17
    %p66 = scmp.eq.s32.totalorder %s65, 0
    %s68 = sadd.s32 %s67, 1
    %s69 = scalar_select %p66, %s67, %s68
    %p72 = pneg %p66
    %p73 = scmp.eq.s32.totalorder %s10, 1
    %p74 = por %p72, %p73
    %p75 = scmp.ne.s32.totalorder %s67, %s70
    %p76 = scmp.eq.s32.totalorder %s10, 0
    %p77 = por %p75, %p76
    %p78 = scmp.ne.s32.totalorder %s67, %s70
    %p79 = scmp.eq.s32.totalorder %s15, 1
    %p80 = por %p78, %p79
    %p81 = scmp.ne.s32.totalorder %s70, %s71
    %p82 = scmp.eq.s32.totalorder %s15, 0
    %p83 = por %p81, %p82
    %p84 = scmp.ne.s32.totalorder %s70, %s71
    %p85 = scmp.eq.s32.totalorder %s16, 1
    %p86 = por %p84, %p85
    %p88 = scmp.ne.s32.totalorder %s71, %s87
    %p89 = scmp.eq.s32.totalorder %s16, 0
    %p90 = por %p88, %p89
    %s91 = ssub.s32 %s10, %s17
    %p92 = scmp.eq.s32.totalorder %s91, 0
    %s94 = sadd.s32 %s93, 1
    %s95 = scalar_select %p92, %s93, %s94
    %p98 = pneg %p92
    %p99 = scmp.eq.s32.totalorder %s10, 1
    %p100 = por %p98, %p99
    %p101 = scmp.ne.s32.totalorder %s93, %s96
    %p102 = scmp.eq.s32.totalorder %s10, 0
    %p103 = por %p101, %p102
    %p104 = scmp.ne.s32.totalorder %s93, %s96
    %p105 = scmp.eq.s32.totalorder %s15, 1
    %p106 = por %p104, %p105
    %p107 = scmp.ne.s32.totalorder %s96, %s97
    %p108 = scmp.eq.s32.totalorder %s15, 0
    %p109 = por %p107, %p108
    %p110 = scmp.ne.s32.totalorder %s96, %s97
    %p111 = scmp.eq.s32.totalorder %s16, 1
    %p112 = por %p110, %p111
    %p114 = scmp.ne.s32.totalorder %s97, %s113
    %p115 = scmp.eq.s32.totalorder %s16, 0
    %p116 = por %p114, %p115
    %p117 = scmp.le.s32.totalorder 1, %s10
    %p118 = scmp.lt.s32.totalorder %s10, 3
    %p119 = pnand %p117, %p118
    %p120 = pneg %p119
    // Predicated region
    $region9: #{unet_down.1} parent=5 // pred_check
      _
    $region10: #{unet_down.1} parent=5 // pred_check_branch
      %122 = sbr.rel (%p119) target = $region12
    $region11: #{unet_down.1} parent=5 // pred_region
      %s123 = ssub.s32 %s10, 1
      // Predicated region
      $region13: #{unet_down.1} parent=11 // pred_check
        %p124 = pneg %p57
      $region14: #{unet_down.1} parent=11 // pred_check_branch
        %126 = sbr.rel (%p124) target = $region16
      $region15: #{unet_down.1} parent=11 // pred_region
        _
      $region16: #{unet_down.1} parent=11 // pred_fallthru
        _
    $region12: #{unet_down.1} parent=5 // pred_fallthru
      _
    %p127 = scmp.lt.s32.totalorder %s10, 2
    // Predicated region
    $region17: #{unet_down.1} parent=5 // pred_check
      %p128 = pneg %p127
    $region18: #{unet_down.1} parent=5 // pred_check_branch
      %130 = sbr.rel (%p128) target = $region20
    $region19: #{unet_down.1} parent=5 // pred_region
      // Predicated region
      $region21: #{unet_down.1} parent=19 // pred_check
        %p131 = pneg %p30
      $region22: #{unet_down.1} parent=19 // pred_check_branch
        %133 = sbr.rel (%p131) target = $region24
      $region23: #{unet_down.1} parent=19 // pred_region
        %s134 = smul.u32 8, %s10
        %p135 = scmp.lt.s32.totalorder %s134, 15
        %s136 = scalar_select %p135, %s134, 15
        %s137 = smul.addr %s136, 4
        %s138 = scalar_lea.vmem %s0, %s137
        %s139 = smul.u32 8, %s10
      $region24: #{unet_down.1} parent=19 // pred_fallthru
        _
    $region20: #{unet_down.1} parent=5 // pred_fallthru
      _
    %p140 = scmp.le.s32.totalorder 1, %s10
    %p141 = scmp.lt.s32.totalorder %s10, 3
    %p142 = pnand %p140, %p141
    %p143 = pneg %p142
    // Predicated region
    $region25: #{unet_down.1} parent=5 // pred_check
      _
    $region26: #{unet_down.1} parent=5 // pred_check_branch
      %145 = sbr.rel (%p142) target = $region28
    $region27: #{unet_down.1} parent=5 // pred_region
      %s146 = ssub.s32 %s10, 1
      %s147 = smul.u32 8, %s15
      %p148 = scmp.lt.s32.totalorder %s147, 15
      %s149 = scalar_select %p148, %s147, 15
      %s150 = smul.addr %s149, 4
      %s151 = scalar_lea.vmem %s0, %s150
      %p152 = pneg %p36
      %p153 = pneg %p33
      %p154 = pneg %p57
      %p155 = pneg %p54
      %p156 = pneg %p83
      %p157 = pneg %p80
      %s158 = smul.u32 8, %s15
      %p159 = scmp.lt.s32.totalorder %s158, 15
      %s160 = scalar_select %p159, %s158, 15
      %s161 = smul.addr %s160, 8
      %s162 = scalar_lea.vmem %s2, %s161
      %p163 = pneg %p109
      %p164 = pneg %p106
      %p165 = scmp.lt.s32.totalorder %s15, 1
      %s166 = scalar_select %p165, %s15, 1
      %s167 = smul.addr %s166, 8
      %s168 = scalar_lea.vmem %s3, %s167
      %s169 = smul.u32 8, %s15
      %p170 = scmp.lt.s32.totalorder %s169, 15
      %s171 = scalar_select %p170, %s169, 15
      %s172 = smul.addr %s171, 4
      %s173 = scalar_lea.vmem %s0, %s172
      %s174 = smul.u32 8, %s15
      %s175 = smul.u32 8, %s15
      %p176 = scmp.lt.s32.totalorder %s175, 15
      %s177 = scalar_select %p176, %s175, 15
      %s178 = smul.addr %s177, 8
      %s179 = scalar_lea.vmem %s2, %s178
      %s180 = smul.u32 8, %s15
      %p181 = scmp.lt.s32.totalorder %s15, 1
      %s182 = scalar_select %p181, %s15, 1
      %s183 = smul.addr %s182, 8
      %s184 = scalar_lea.vmem %s3, %s183
      %v186 = vld [vmem:[%s173] sm:$0xf]
      %v187 = vld [vmem:[%s173 + $0x4] sm:$0xf]
      %v188 = vld [vmem:[%s173 + $0x8] sm:$0xf]
      %v189 = vld [vmem:[%s173 + $0xc] sm:$0xf]
      %v190 = vld [vmem:[%s173 + $0x10] sm:$0xf]
      %v191 = vld [vmem:[%s173 + $0x14] sm:$0xf]
      %v192 = vld [vmem:[%s173 + $0x18] sm:$0xf]
      %v193 = vld [vmem:[%s173 + $0x1c] sm:$0xf]
      %v194 = vld [vmem:[%s1] sm:$0xf]
      %v195 = vld [vmem:[%s1 + $0x4] sm:$0xf]
      %v196 = vld [vmem:[%s1 + $0x8] sm:$0xf]
      %v197 = vld [vmem:[%s1 + $0xc] sm:$0xf]
      %v198 = vld [vmem:[%s1 + $0x10] sm:$0xf]
      %v199 = vld [vmem:[%s1 + $0x14] sm:$0xf]
      %v200 = vld [vmem:[%s1 + $0x18] sm:$0xf]
      %v201 = vld [vmem:[%s1 + $0x1c] sm:$0xf]
      %v202 = vld [vmem:[%s1 + $0x20] sm:$0xf]
      %v203 = vld [vmem:[%s1 + $0x24] sm:$0xf]
      %v204 = vld [vmem:[%s1 + $0x28] sm:$0xf]
      %v205 = vld [vmem:[%s1 + $0x2c] sm:$0xf]
      %v206 = vld [vmem:[%s1 + $0x30] sm:$0xf]
      %v207 = vld [vmem:[%s1 + $0x34] sm:$0xf]
      %v208 = vld [vmem:[%s1 + $0x38] sm:$0xf]
      %v209 = vld [vmem:[%s1 + $0x3c] sm:$0xf]
      %v218 = vunpack.c.l.b16 %v186
      %v219 = vunpack.c.l.b16 %v187
      %v220 = vunpack.c.l.b16 %v188
      %v221 = vunpack.c.l.b16 %v189
      %v222 = vunpack.c.l.b16 %v190
      %v223 = vunpack.c.l.b16 %v191
      %v224 = vunpack.c.l.b16 %v192
      %v225 = vunpack.c.l.b16 %v193
      %v226 = vpack.c.b16 %v219, %v218
      %v227 = vpack.c.b16 %v221, %v220
      %v228 = vpack.c.b16 %v223, %v222
      %v229 = vpack.c.b16 %v225, %v224
      %v250 = vunpack.c.l.b16 %v194
      %v251 = vunpack.c.l.b16 %v195
      %v252 = vunpack.c.l.b16 %v196
      %v253 = vunpack.c.l.b16 %v197
      %v254 = vunpack.c.l.b16 %v198
      %v255 = vunpack.c.l.b16 %v199
      %v256 = vunpack.c.l.b16 %v200
      %v257 = vunpack.c.l.b16 %v201
      %v258 = vunpack.c.l.b16 %v202
      %v259 = vunpack.c.l.b16 %v203
      %v260 = vunpack.c.l.b16 %v204
      %v261 = vunpack.c.l.b16 %v205
      %v262 = vunpack.c.l.b16 %v206
      %v263 = vunpack.c.l.b16 %v207
      %v264 = vunpack.c.l.b16 %v208
      %v265 = vunpack.c.l.b16 %v209
      %v266 = vpack.c.b16 %v251, %v250
      %v267 = vpack.c.b16 %v253, %v252
      %v268 = vpack.c.b16 %v255, %v254
      %v269 = vpack.c.b16 %v257, %v256
      %v270 = vpack.c.b16 %v259, %v258
      %v271 = vpack.c.b16 %v261, %v260
      %v272 = vpack.c.b16 %v263, %v262
      %v273 = vpack.c.b16 %v265, %v264
      %282 = vmatprep.subr.bf16.mxu0 0
      %283 = vmatpush1.bf16.msra.mxu0 %v273
      %284 = vmatprep.subr.bf16.mxu0 0
      %285 = vmatpush1.bf16.msra.mxu0 %v272
      %286 = vmatprep.subr.bf16.mxu0 0
      %287 = vmatpush1.bf16.msra.mxu0 %v271
      %288 = vmatprep.subr.bf16.mxu0 0
      %289 = vmatpush1.bf16.msra.mxu0 %v270
      %290 = vmatprep.subr.bf16.mxu0 0
      %291 = vmatpush1.bf16.msra.mxu0 %v269
      %292 = vmatprep.subr.bf16.mxu0 0
      %293 = vmatpush1.bf16.msra.mxu0 %v268
      %294 = vmatprep.subr.bf16.mxu0 0
      %295 = vmatpush1.bf16.msra.mxu0 %v267
      %296 = vmatprep.subr.bf16.mxu0 0
      %297 = vmatpush1.bf16.msra.mxu0 %v266
      %298 = vmatprep.subr.bf16.mxu0 0
      %299 = vmatpush2.bf16.msra.mxu0 0
      %300 = vmatprep.subr.bf16.mxu0 0
      %301 = vmatpush2.bf16.msra.mxu0 0
      %302 = vmatprep.subr.bf16.mxu0 0
      %303 = vmatpush2.bf16.msra.mxu0 0
      %304 = vmatprep.subr.bf16.mxu0 0
      %305 = vmatpush2.bf16.msra.mxu0 0
      %306 = vmatprep.subr.bf16.mxu0 0
      %307 = vmatpush2.bf16.msra.mxu0 0
      %308 = vmatprep.subr.bf16.mxu0 0
      %309 = vmatpush2.bf16.msra.mxu0 0
      %310 = vmatprep.subr.bf16.mxu0 0
      %311 = vmatpush2.bf16.msra.mxu0 0
      %312 = vmatprep.subr.bf16.mxu0 0
      %313 = vmatpush2.bf16.msra.mxu0 0
      %314 = vmatprep.mubr.bf16.mxu0 0
      %315 = vmatmul.mubr.bf16.gmra.mxu0 %v226
      %v316 = vpop.f32.mrf.mxu0
      %v317 = vadd.f32 0.0, %v316
      %v318 = vpop.f32.mrf.mxu0
      %v319 = vpop.f32.mrf.mxu0
      %v320 = vadd.f32 0.0, %v319
      %v321 = vpop.f32.mrf.mxu0
      %322 = vmatprep.mubr.bf16.mxu0 0
      %323 = vmatmul.mubr.bf16.gmra.mxu0 %v227
      %v324 = vpop.f32.mrf.mxu0
      %v325 = vadd.f32 0.0, %v324
      %v326 = vpop.f32.mrf.mxu0
      %v327 = vpop.f32.mrf.mxu0
      %v328 = vadd.f32 0.0, %v327
      %v329 = vpop.f32.mrf.mxu0
      %330 = vmatprep.mubr.bf16.mxu0 0
      %331 = vmatmul.mubr.bf16.gmra.mxu0 %v228
      %v332 = vpop.f32.mrf.mxu0
      %v333 = vadd.f32 0.0, %v332
      %v334 = vpop.f32.mrf.mxu0
      %v335 = vpop.f32.mrf.mxu0
      %v336 = vadd.f32 0.0, %v335
      %v337 = vpop.f32.mrf.mxu0
      %338 = vmatprep.mubr.bf16.mxu0 0
      %339 = vmatmul.mubr.bf16.gmra.mxu0 %v229
      %v340 = vpop.f32.mrf.mxu0
      %v341 = vadd.f32 0.0, %v340
      %v342 = vpop.f32.mrf.mxu0
      %v343 = vpop.f32.mrf.mxu0
      %v344 = vadd.f32 0.0, %v343
      %v345 = vpop.f32.mrf.mxu0
      %346 = vdwg.mxu0
      %347 = vst [vmem:[%s179] sm:$0xff] %v317
      %348 = vst [vmem:[%s179 + $0x8] sm:$0xff] %v320
      %349 = vst [vmem:[%s179 + $0x10] sm:$0xff] %v325
      %350 = vst [vmem:[%s179 + $0x18] sm:$0xff] %v328
      %351 = vst [vmem:[%s179 + $0x20] sm:$0xff] %v333
      %352 = vst [vmem:[%s179 + $0x28] sm:$0xff] %v336
      %353 = vst [vmem:[%s179 + $0x30] sm:$0xff] %v341
      %354 = vst [vmem:[%s179 + $0x38] sm:$0xff] %v344
      %v355 = vadd.f32 %v317, %v320
      %v356 = vadd.f32 %v355, %v325
      %v357 = vadd.f32 %v356, %v328
      %v358 = vadd.f32 %v357, %v333
      %v359 = vadd.f32 %v358, %v336
      %v360 = vadd.f32 %v359, %v341
      %v361 = vadd.f32 %v360, %v344
      %v362 = vrot.slane %v361, 4
      %v363 = vadd.f32 %v361, %v362
      %v364 = vrot.slane %v363, 2
      %v365 = vadd.f32 %v363, %v364
      %v366 = vrot.slane %v365, 1
      %v367 = vadd.f32 %v365, %v366
      %368 = vst [vmem:[%s184] sm:$0x1] %v367
      %v369 = vmul.f32 %v317, %v317
      %v370 = vmul.f32 %v320, %v320
      %v371 = vmul.f32 %v325, %v325
      %v372 = vmul.f32 %v328, %v328
      %v373 = vmul.f32 %v333, %v333
      %v374 = vmul.f32 %v336, %v336
      %v375 = vmul.f32 %v341, %v341
      %v376 = vmul.f32 %v344, %v344
      %v377 = vadd.f32 %v369, %v370
      %v378 = vadd.f32 %v377, %v371
      %v379 = vadd.f32 %v378, %v372
      %v380 = vadd.f32 %v379, %v373
      %v381 = vadd.f32 %v380, %v374
      %v382 = vadd.f32 %v381, %v375
      %v383 = vadd.f32 %v382, %v376
      %v384 = vrot.slane %v383, 4
      %v385 = vadd.f32 %v383, %v384
      %v386 = vrot.slane %v385, 2
      %v387 = vadd.f32 %v385, %v386
      %v388 = vrot.slane %v387, 1
      %v389 = vadd.f32 %v387, %v388
      %390 = vst [vmem:[%s184 + $0x1] sm:$0x1] %v389
      %s391 = smul.u32 8, %s15
      %p392 = scmp.lt.s32.totalorder %s391, 15
      %s393 = scalar_select %p392, %s391, 15
      %s394 = smul.addr %s393, 8
      %s395 = scalar_lea.vmem %s2, %s394
      %p396 = scmp.lt.s32.totalorder %s15, 1
      %s397 = scalar_select %p396, %s15, 1
      %s398 = smul.addr %s397, 8
      %s399 = scalar_lea.vmem %s3, %s398
      // Predicated region
      $region29: #{unet_down.1} parent=27 // pred_check
        %p400 = pneg %p80
      $region30: #{unet_down.1} parent=27 // pred_check_branch
        %402 = sbr.rel (%p400) target = $region32
      $region31: #{unet_down.1} parent=27 // pred_region
        %s403 = smul.u32 8, %s15
      $region32: #{unet_down.1} parent=27 // pred_fallthru
        _
      // Predicated region
      $region33: #{unet_down.1} parent=27 // pred_check
        %p404 = pneg %p106
      $region34: #{unet_down.1} parent=27 // pred_check_branch
        %406 = sbr.rel (%p404) target = $region36
      $region35: #{unet_down.1} parent=27 // pred_region
        _
      $region36: #{unet_down.1} parent=27 // pred_fallthru
        _
    $region28: #{unet_down.1} parent=5 // pred_fallthru
      _
    %p407 = scmp.le.s32.totalorder 2, %s10
    // Predicated region
    $region37: #{unet_down.1} parent=5 // pred_check
      %p408 = pneg %p407
    $region38: #{unet_down.1} parent=5 // pred_check_branch
      %410 = sbr.rel (%p408) target = $region40
    $region39: #{unet_down.1} parent=5 // pred_region
      %s411 = ssub.s32 %s10, 2
      // Predicated region
      $region41: #{unet_down.1} parent=39 // pred_check
        %p412 = pneg %p86
      $region42: #{unet_down.1} parent=39 // pred_check_branch
        %414 = sbr.rel (%p412) target = $region44
      $region43: #{unet_down.1} parent=39 // pred_region
        %s415 = smul.u32 8, %s16
        %p416 = scmp.lt.s32.totalorder %s415, 15
        %s417 = scalar_select %p416, %s415, 15
        %s418 = smul.addr %s417, 8
        %s419 = scalar_lea.vmem %s2, %s418
      $region44: #{unet_down.1} parent=39 // pred_fallthru
        _
      // Predicated region
      $region45: #{unet_down.1} parent=39 // pred_check
        %p420 = pneg %p112
      $region46: #{unet_down.1} parent=39 // pred_check_branch
        %422 = sbr.rel (%p420) target = $region48
      $region47: #{unet_down.1} parent=39 // pred_region
        %p423 = scmp.lt.s32.totalorder %s16, 1
        %s424 = scalar_select %p423, %s16, 1
        %s425 = smul.addr %s424, 8
        %s426 = scalar_lea.vmem %s3, %s425
      $region48: #{unet_down.1} parent=39 // pred_fallthru
        _
    $region40: #{unet_down.1} parent=5 // pred_fallthru
      _
  $region6: #{unet_down.1} parent=0 // loop_footer
    %s14 = sadd.s32 1, %s10
  $region7: #{unet_down.1} parent=0 // loop_footer_branch
    %9 = sbr.rel target = $region3
  $region8: #{unet_down.1} parent=0 // loop_exit
    _

</llo_original>
